<compile_context>
chip_gen: v7x
topology: tpu7x:2x2x1
jax: 0.10.0
libtpu: 0.0.40
codegen_flags: <defaults>
</compile_context>

<pallas_src>
import jax
import jax.numpy as jnp
from jax import lax
from jax.experimental import pallas as pl
from jax.experimental.pallas import tpu as pltpu

CIN, COUT, KH, KW = 6, 16, 5, 5
BLOCK_BATCH = 8  # images per grid step (clamped to N)


def _cs2_kernel(x_ref, w_ref, b_ref, o_ref):
    # x_ref: (1, Nb*P + 8, W*CIN)        packed input rows (zero padded)
    # w_ref: (KH, W*CIN, OW*COUT)        block-Toeplitz conv weights, one per kh
    # b_ref: (1, OW*COUT)                bias tiled along the ow axis
    # o_ref: (1, Nb*P - 1, (OW-1)*COUT)  pooled values live at rows n*P + 2*ph,
    #                                    lanes (2*pw)*COUT + co (rest is garbage)
    m = o_ref.shape[1] + 1      # Nb * P conv-output rows (incl. unused rows)
    owc = b_ref.shape[1]        # OW * COUT

    # Convolution: KH shifted matmuls; the width taps live in the Toeplitz rhs.
    acc = jnp.dot(x_ref[0, 0:m, :], w_ref[0], preferred_element_type=jnp.float32)
    for kh in range(1, KH):
        acc = acc + jnp.dot(x_ref[0, kh:kh + m, :], w_ref[kh],
                            preferred_element_type=jnp.float32)

    y = jnp.tanh(acc + b_ref[...])                      # (m, OW*COUT)

    # 2x2 / stride-2 max pool via shifted full-width maxima.
    yw = jnp.maximum(y[:, :owc - COUT], y[:, COUT:])    # width pairs  (m, (OW-1)*COUT)
    z = jnp.maximum(yw[:m - 1, :], yw[1:m, :])          # height pairs (m-1, ...)
    o_ref[0] = z.astype(o_ref.dtype)


@jax.jit
def cs2_forward(x_nchw, weight, bias):
    """x_nchw: (N, 6, H, W); weight: (16, 6, 5, 5) OIHW; bias: (16,)."""
    N, C, H, W = x_nchw.shape
    assert C == CIN
    OH, OW = H - KH + 1, W - KW + 1
    PH, PW = OH // 2, OW // 2

    nb = max(1, min(BLOCK_BATCH, N))    # images per grid step
    ng = -(-N // nb)                    # grid steps
    p = -(-H // 8) * 8                  # padded rows per image (>= H)
    m = nb * p                          # conv-output rows per block
    r = m + 8                           # input rows per block (covers kh overrun)
    wc = W * CIN
    owc = OW * COUT

    # ---- pack input: (N, C, H, W) -> (ng, r, W*CIN), zero padded (XLA, ~free) ----
    x = jnp.transpose(x_nchw, (0, 2, 3, 1)).reshape(N, H, wc)
    x = jnp.pad(x, ((0, ng * nb - N), (0, p - H), (0, 0)))
    x = x.reshape(ng, m, wc)
    x = jnp.pad(x, ((0, 0), (0, r - m), (0, 0)))

    # ---- block-Toeplitz weights: wk[kh, iw*CIN+ci, ow*COUT+co] = w[co,ci,kh,iw-ow] ----
    w_perm = jnp.transpose(weight, (2, 3, 1, 0)).astype(x.dtype)   # (KH, KW, CIN, COUT)
    wk = jnp.zeros((KH, wc, owc), x.dtype)
    for kw in range(KW):
        for ow in range(OW):
            iw = ow + kw
            wk = wk.at[:, iw * CIN:(iw + 1) * CIN,
                       ow * COUT:(ow + 1) * COUT].set(w_perm[:, kw])

    b_wide = jnp.tile(bias.astype(x.dtype), OW).reshape(1, owc)

    out_blocks = pl.pallas_call(
        _cs2_kernel,
        out_shape=jax.ShapeDtypeStruct((ng, m - 1, owc - COUT), x.dtype),
        grid_spec=pltpu.PrefetchScalarGridSpec(
            num_scalar_prefetch=0,
            grid=(ng,),
            in_specs=[
                pl.BlockSpec((1, r, wc), lambda g: (g, 0, 0)),
                pl.BlockSpec((KH, wc, owc), lambda g: (0, 0, 0)),
                pl.BlockSpec((1, owc), lambda g: (0, 0)),
            ],
            out_specs=pl.BlockSpec((1, m - 1, owc - COUT), lambda g: (g, 0, 0)),
        ),
        compiler_params=pltpu.CompilerParams(
            dimension_semantics=("parallel",)),
    )(x, wk, b_wide)

    # ---- extract pooled entries: rows n*p + 2*ph, lanes (2*pw)*COUT + co ----
    o = jnp.pad(out_blocks, ((0, 0), (0, 1), (0, 0)))        # back to (ng, m, lanes)
    o = o.reshape(ng, nb, p, OW - 1, COUT)
    o = o[:, :, 0:2 * PH:2, 0:2 * PW:2, :]                   # (ng, nb, PH, PW, COUT)
    o = o.reshape(ng * nb, PH, PW, COUT)[:N]
    return jnp.transpose(o, (0, 3, 1, 2))                    # NCHW (N, 16, PH, PW)


if __name__ == "__main__":
    key = jax.random.PRNGKey(0)
    kx, kw_, kb = jax.random.split(key, 3)

    N, H, W = 2, 14, 14  # classic LeNet shapes for this stage: (N, 6, 14, 14)
    x = jax.random.normal(kx, (N, CIN, H, W), dtype=jnp.float32)

    # Deterministic parameter init (PyTorch-style uniform bound 1/sqrt(fan_in)).
    fan_in = CIN * KH * KW
    bound = 1.0 / (fan_in ** 0.5)
    weight = jax.random.uniform(kw_, (COUT, CIN, KH, KW), dtype=jnp.float32,
                                minval=-bound, maxval=bound)
    bias = jax.random.uniform(kb, (COUT,), dtype=jnp.float32,
                              minval=-bound, maxval=bound)

    out = jax.block_until_ready(cs2_forward(x, weight, bias))

    # Pure-JAX reference for correctness.
    conv = lax.conv_general_dilated(x, weight, window_strides=(1, 1),
                                    padding="VALID",
                                    dimension_numbers=("NCHW", "OIHW", "NCHW"))
    act = jnp.tanh(conv + bias.reshape(1, COUT, 1, 1))
    ref = lax.reduce_window(act, -jnp.inf, lax.max,
                            (1, 1, 2, 2), (1, 1, 2, 2), "VALID")

    assert out.shape == ref.shape == (N, COUT, 5, 5)
    assert jnp.allclose(out, ref, atol=1e-5, rtol=1e-5)
    print("KERNEL_OK")
</pallas_src>

<mosaic_0001>
module attributes {stable_mosaic.version = 11 : i64} {
  func.func @_cs2_kernel(%arg0: i32, %arg1: memref<1x40x84xf32, #tpu.memory_space<vmem>>, %arg2: memref<5x84x160xf32, #tpu.memory_space<vmem>>, %arg3: memref<1x160xf32, #tpu.memory_space<vmem>>, %arg4: memref<1x31x144xf32, #tpu.memory_space<vmem>>) attributes {dimension_semantics = [#tpu.dimension_semantics<parallel>], iteration_bounds = array<i64: 1>, scalar_prefetch = 0 : i64, scratch_operands = 0 : i64, tpu.core_type = #tpu.core_type<tc>, window_params = [{transform_indices = @transform_0, window_bounds = array<i64: 1, 40, 84>}, {pipeline_mode = #tpu.pipeline_mode<synchronous>, transform_indices = @transform_1, window_bounds = array<i64: 5, 84, 160>}, {pipeline_mode = #tpu.pipeline_mode<synchronous>, transform_indices = @transform_2, window_bounds = array<i64: 1, 160>}, {transform_indices = @transform_3, window_bounds = array<i64: 1, 31, 144>}]} {
    %c0 = arith.constant 0 : index
    %c0_0 = arith.constant 0 : index
    %c0_1 = arith.constant 0 : index
    %0 = vector.load %arg1[%c0, %c0_0, %c0_1] : memref<1x40x84xf32, #tpu.memory_space<vmem>>, vector<1x32x84xf32>
    %1 = vector.shape_cast %0 : vector<1x32x84xf32> to vector<32x84xf32>
    %c0_2 = arith.constant 0 : index
    %c0_3 = arith.constant 0 : index
    %c0_4 = arith.constant 0 : index
    %2 = vector.load %arg2[%c0_2, %c0_3, %c0_4] : memref<5x84x160xf32, #tpu.memory_space<vmem>>, vector<1x84x160xf32>
    %3 = vector.shape_cast %2 : vector<1x84x160xf32> to vector<84x160xf32>
    %cst = arith.constant dense<0.000000e+00> : vector<32x160xf32>
    %4 = tpu.matmul %1, %3, %cst {dimension_numbers = #tpu.dot_dimension_numbers<[1], [0], [0], [1], [0, 0, 1, 1], [], []>} : vector<32x84xf32>, vector<84x160xf32>, vector<32x160xf32> -> vector<32x160xf32>
    %c0_5 = arith.constant 0 : index
    %c1 = arith.constant 1 : index
    %c0_6 = arith.constant 0 : index
    %5 = vector.load %arg1[%c0_5, %c1, %c0_6] : memref<1x40x84xf32, #tpu.memory_space<vmem>>, vector<1x32x84xf32>
    %6 = vector.shape_cast %5 : vector<1x32x84xf32> to vector<32x84xf32>
    %c1_7 = arith.constant 1 : index
    %c0_8 = arith.constant 0 : index
    %c0_9 = arith.constant 0 : index
    %7 = vector.load %arg2[%c1_7, %c0_8, %c0_9] : memref<5x84x160xf32, #tpu.memory_space<vmem>>, vector<1x84x160xf32>
    %8 = vector.shape_cast %7 : vector<1x84x160xf32> to vector<84x160xf32>
    %cst_10 = arith.constant dense<0.000000e+00> : vector<32x160xf32>
    %9 = tpu.matmul %6, %8, %cst_10 {dimension_numbers = #tpu.dot_dimension_numbers<[1], [0], [0], [1], [0, 0, 1, 1], [], []>} : vector<32x84xf32>, vector<84x160xf32>, vector<32x160xf32> -> vector<32x160xf32>
    %10 = arith.addf %4, %9 : vector<32x160xf32>
    %c0_11 = arith.constant 0 : index
    %c2 = arith.constant 2 : index
    %c0_12 = arith.constant 0 : index
    %11 = vector.load %arg1[%c0_11, %c2, %c0_12] : memref<1x40x84xf32, #tpu.memory_space<vmem>>, vector<1x32x84xf32>
    %12 = vector.shape_cast %11 : vector<1x32x84xf32> to vector<32x84xf32>
    %c2_13 = arith.constant 2 : index
    %c0_14 = arith.constant 0 : index
    %c0_15 = arith.constant 0 : index
    %13 = vector.load %arg2[%c2_13, %c0_14, %c0_15] : memref<5x84x160xf32, #tpu.memory_space<vmem>>, vector<1x84x160xf32>
    %14 = vector.shape_cast %13 : vector<1x84x160xf32> to vector<84x160xf32>
    %cst_16 = arith.constant dense<0.000000e+00> : vector<32x160xf32>
    %15 = tpu.matmul %12, %14, %cst_16 {dimension_numbers = #tpu.dot_dimension_numbers<[1], [0], [0], [1], [0, 0, 1, 1], [], []>} : vector<32x84xf32>, vector<84x160xf32>, vector<32x160xf32> -> vector<32x160xf32>
    %16 = arith.addf %10, %15 : vector<32x160xf32>
    %c0_17 = arith.constant 0 : index
    %c3 = arith.constant 3 : index
    %c0_18 = arith.constant 0 : index
    %17 = vector.load %arg1[%c0_17, %c3, %c0_18] : memref<1x40x84xf32, #tpu.memory_space<vmem>>, vector<1x32x84xf32>
    %18 = vector.shape_cast %17 : vector<1x32x84xf32> to vector<32x84xf32>
    %c3_19 = arith.constant 3 : index
    %c0_20 = arith.constant 0 : index
    %c0_21 = arith.constant 0 : index
    %19 = vector.load %arg2[%c3_19, %c0_20, %c0_21] : memref<5x84x160xf32, #tpu.memory_space<vmem>>, vector<1x84x160xf32>
    %20 = vector.shape_cast %19 : vector<1x84x160xf32> to vector<84x160xf32>
    %cst_22 = arith.constant dense<0.000000e+00> : vector<32x160xf32>
    %21 = tpu.matmul %18, %20, %cst_22 {dimension_numbers = #tpu.dot_dimension_numbers<[1], [0], [0], [1], [0, 0, 1, 1], [], []>} : vector<32x84xf32>, vector<84x160xf32>, vector<32x160xf32> -> vector<32x160xf32>
    %22 = arith.addf %16, %21 : vector<32x160xf32>
    %c0_23 = arith.constant 0 : index
    %c4 = arith.constant 4 : index
    %c0_24 = arith.constant 0 : index
    %23 = vector.load %arg1[%c0_23, %c4, %c0_24] : memref<1x40x84xf32, #tpu.memory_space<vmem>>, vector<1x32x84xf32>
    %24 = vector.shape_cast %23 : vector<1x32x84xf32> to vector<32x84xf32>
    %c4_25 = arith.constant 4 : index
    %c0_26 = arith.constant 0 : index
    %c0_27 = arith.constant 0 : index
    %25 = vector.load %arg2[%c4_25, %c0_26, %c0_27] : memref<5x84x160xf32, #tpu.memory_space<vmem>>, vector<1x84x160xf32>
    %26 = vector.shape_cast %25 : vector<1x84x160xf32> to vector<84x160xf32>
    %cst_28 = arith.constant dense<0.000000e+00> : vector<32x160xf32>
    %27 = tpu.matmul %24, %26, %cst_28 {dimension_numbers = #tpu.dot_dimension_numbers<[1], [0], [0], [1], [0, 0, 1, 1], [], []>} : vector<32x84xf32>, vector<84x160xf32>, vector<32x160xf32> -> vector<32x160xf32>
    %28 = arith.addf %22, %27 : vector<32x160xf32>
    %c0_29 = arith.constant 0 : index
    %c0_30 = arith.constant 0 : index
    %29 = vector.load %arg3[%c0_29, %c0_30] : memref<1x160xf32, #tpu.memory_space<vmem>>, vector<1x160xf32>
    %30 = vector.broadcast %29 : vector<1x160xf32> to vector<32x160xf32>
    %31 = arith.addf %28, %30 : vector<32x160xf32>
    %32 = math.tanh %31 : vector<32x160xf32>
    %33 = vector.extract_strided_slice %32 {offsets = [0, 0], sizes = [32, 144], strides = [1, 1]} : vector<32x160xf32> to vector<32x144xf32>
    %34 = vector.extract_strided_slice %32 {offsets = [0, 16], sizes = [32, 144], strides = [1, 1]} : vector<32x160xf32> to vector<32x144xf32>
    %35 = arith.maximumf %33, %34 : vector<32x144xf32>
    %36 = vector.extract_strided_slice %35 {offsets = [0, 0], sizes = [31, 144], strides = [1, 1]} : vector<32x144xf32> to vector<31x144xf32>
    %37 = vector.extract_strided_slice %35 {offsets = [1, 0], sizes = [31, 144], strides = [1, 1]} : vector<32x144xf32> to vector<31x144xf32>
    %38 = arith.maximumf %36, %37 : vector<31x144xf32>
    %c0_31 = arith.constant 0 : index
    %c0_32 = arith.constant 0 : index
    %c0_33 = arith.constant 0 : index
    %39 = vector.load %arg4[%c0_31, %c0_32, %c0_33] : memref<1x31x144xf32, #tpu.memory_space<vmem>>, vector<1x31x144xf32>
    %40 = vector.shape_cast %39 : vector<1x31x144xf32> to vector<31x144xf32>
    %41 = vector.shape_cast %38 : vector<31x144xf32> to vector<1x31x144xf32>
    tpu.vector_store %arg4[%c0_31, %c0_32, %c0_33], %41 {strides = array<i32>} : memref<1x31x144xf32, #tpu.memory_space<vmem>>, vector<1x31x144xf32>,
    return
  }
  func.func @transform_0(%arg0: i32) -> (i32, i32, i32) {
    %c0_i32 = arith.constant 0 : i32
    %c0_i32_0 = arith.constant 0 : i32
    %c0_i32_1 = arith.constant 0 : i32
    return %arg0, %c0_i32, %c0_i32_0 : i32, i32, i32
  }
  func.func @transform_1(%arg0: i32) -> (i32, i32, i32) {
    %c0_i32 = arith.constant 0 : i32
    %c0_i32_0 = arith.constant 0 : i32
    %c0_i32_1 = arith.constant 0 : i32
    %c0_i32_2 = arith.constant 0 : i32
    return %c0_i32, %c0_i32_0, %c0_i32_1 : i32, i32, i32
  }
  func.func @transform_2(%arg0: i32) -> (i32, i32) {
    %c0_i32 = arith.constant 0 : i32
    %c0_i32_0 = arith.constant 0 : i32
    %c0_i32_1 = arith.constant 0 : i32
    return %c0_i32, %c0_i32_0 : i32, i32
  }
  func.func @transform_3(%arg0: i32) -> (i32, i32, i32) {
    %c0_i32 = arith.constant 0 : i32
    %c0_i32_0 = arith.constant 0 : i32
    %c0_i32_1 = arith.constant 0 : i32
    return %arg0, %c0_i32, %c0_i32_0 : i32, i32, i32
  }
}

</mosaic_0001>

<llo_original>
// kernel: tile.9
$region0: #{tile.9}
  %s0 = inlined_call_operand.vmem [shape: f32[10,16], index: 0, kind: input, shape index: {}]
  %s1 = inlined_call_operand.vmem [shape: f32[1,160], index: 1, kind: output, shape index: {}]
  $region1: #{tile.9} parent=0
    #allocation0 [shape = 'u8[8192]{0}', space=vmem, size = 0x2000, scoped, tag = 'scoped mem for output reshape']
    %s2 = smov 3
    %v3 = vld [vmem:[%s0] ss:$8 sm:%s2]
    %vm4 = vcmask 130048
    %5 = vst.msk [vmem:[#allocation0] ss:$8 sm:$0x3] %vm4, %v3
    %s6 = scalar_lea.vmem %s0, 7
    %v7 = vld [vmem:[%s6] sm:$0x1]
    %8 = vrot.lane.b32.xlu0 %v7, 112
    %v9 = vpop.permute.xlu0 %8
    %vm10 = vcmask 1048448
    %11 = vst.msk [vmem:[#allocation0] sm:$0x1] %vm10, %v9
    %s12 = scalar_lea.vmem %s0, 6
    %v13 = vld [vmem:[%s12] sm:$0x1]
    %14 = vrot.lane.b32.xlu0 %v13, 96
    %v15 = vpop.permute.xlu0 %14
    %vm16 = vcmask 917248
    %17 = vst.msk [vmem:[#allocation0] sm:$0x1] %vm16, %v15
    %s18 = scalar_lea.vmem %s0, 5
    %v19 = vld [vmem:[%s18] sm:$0x1]
    %20 = vrot.lane.b32.xlu0 %v19, 80
    %v21 = vpop.permute.xlu0 %20
    %vm22 = vcmask 786048
    %23 = vst.msk [vmem:[#allocation0] sm:$0x1] %vm22, %v21
    %s24 = scalar_lea.vmem %s0, 4
    %v25 = vld [vmem:[%s24] sm:$0x1]
    %26 = vrot.lane.b32.xlu0 %v25, 64
    %v27 = vpop.permute.xlu0 %26
    %vm28 = vcmask 654848
    %29 = vst.msk [vmem:[#allocation0] sm:$0x1] %vm28, %v27
    %s30 = scalar_lea.vmem %s0, 3
    %v31 = vld [vmem:[%s30] sm:$0x1]
    %32 = vrot.lane.b32.xlu0 %v31, 48
    %v33 = vpop.permute.xlu0 %32
    %vm34 = vcmask 523648
    %35 = vst.msk [vmem:[#allocation0] sm:$0x1] %vm34, %v33
    %s36 = scalar_lea.vmem %s0, 2
    %v37 = vld [vmem:[%s36] sm:$0x1]
    %38 = vrot.lane.b32.xlu0 %v37, 32
    %v39 = vpop.permute.xlu0 %38
    %vm40 = vcmask 392448
    %41 = vst.msk [vmem:[#allocation0] sm:$0x1] %vm40, %v39
    %s42 = scalar_lea.vmem %s0, 1
    %s43 = smov 3
    %v44 = vld [vmem:[%s42] ss:$8 sm:%s43]
    %45 = vrot.lane.b32.xlu0 %v44, 16
    %v46 = vpop.permute.xlu0 %45
    %vm47 = vcmask 261248
    %48 = vst.msk [vmem:[#allocation0] ss:$8 sm:$0x3] %vm47, %v46
    %s50 = sshllo.u32 0, 1
    %v52 = vld [vmem:[#allocation0] sm:%s50]
    %s53 = sshllo.u32 0, 1
    %54 = vst [vmem:[%s1] sm:%s53] %v52
    %s55 = scalar_lea.vmem [#allocation0], 8
    %v56 = vld [vmem:[%s55] sm:%s50]
    %s57 = sshllo.u32 0, 1
    %s58 = scalar_lea.vmem %s1, 1
    %59 = vst [vmem:[%s58] sm:%s57] %v56

// kernel: tile.8
$region0: #{tile.8}
  #allocation0 [shape = 's32[1]{0}', space=sflag, size = 0x4, scoped, tag = 'scoped memory for tile.8']
  %s0 = inlined_call_operand.vmem [shape: f32[16], index: 0, kind: input, shape index: {}]
  %s1 = inlined_call_operand.vmem [shape: f32[10,16], index: 1, kind: output, shape index: {}]
  // Predicated region
  $region2: #{tile.8} parent=0 // pred_check
    _
  $region3: #{tile.8} parent=0 // pred_check_branch
    %3 = sbr.rel (0) target = $region5
  $region4: #{tile.8} parent=0 // pred_region
    _
  $region5: #{tile.8} parent=0 // pred_fallthru
    _
  %v4 = vld [vmem:[%s0] ss:$0 sm:$0xff]
  %5 = vst [vmem:[%s1] sm:$0xff] %v4
  %s6 = scalar_lea.vmem %s1, 8
  %7 = vst [vmem:[%s6] sm:$0xff] %v4

// kernel: cs2_forward.1
$region0: #{cs2_forward.1}
  #allocation0 [shape = 'u32[]', space=smem, size = 0x4, offset = 0x4, fixed_abs, tag = 'smem constant byte address 0x4 - core index']
  #allocation1 [shape = 'u32[144,128]{1,0:T(1,128)}', space=vmem, size = 0x12000, scoped, tag = 'internal scratch']
  %s0 = inlined_call_operand.vmem [shape: f32[1,40,84], index: 0, kind: input, shape index: {}]
  %s1 = inlined_call_operand.vmem [shape: f32[5,84,160], index: 1, kind: input, shape index: {}]
  %s2 = inlined_call_operand.vmem [shape: f32[1,160], index: 2, kind: input, shape index: {}]
  %s3 = inlined_call_operand.vmem [shape: f32[1,31,144], index: 3, kind: output, shape index: {}]
  %s4 = sld [smem:[#allocation0]]
  $region22: #{cs2_forward.1} parent=0
    _
  %s6 = ssub.s32 1, %s4
  %s7 = scalar_select 0, %s6, %s4
  // Predicated region
  $region2: #{cs2_forward.1} parent=0 // pred_check
    _
  $region3: #{cs2_forward.1} parent=0 // pred_check_branch
    %9 = sbr.rel (0) target = $region5
  $region4: #{cs2_forward.1} parent=0 // pred_region
    _
  $region5: #{cs2_forward.1} parent=0 // pred_fallthru
    _
  // Predicated region
  $region6: #{cs2_forward.1} parent=0 // pred_check
    _
  $region7: #{cs2_forward.1} parent=0 // pred_check_branch
    %11 = sbr.rel (0) target = $region9
  $region8: #{cs2_forward.1} parent=0 // pred_region
    _
  $region9: #{cs2_forward.1} parent=0 // pred_fallthru
    _
  // Predicated region
  $region10: #{cs2_forward.1} parent=0 // pred_check
    _
  $region11: #{cs2_forward.1} parent=0 // pred_check_branch
    %13 = sbr.rel (0) target = $region13
  $region12: #{cs2_forward.1} parent=0 // pred_region
    _
  $region13: #{cs2_forward.1} parent=0 // pred_fallthru
    _
  %v14 = vld [vmem:[%s0] sm:$0xff]
  %v15 = vld [vmem:[%s0 + $0x8] sm:$0xff]
  %v16 = vld [vmem:[%s0 + $0x10] sm:$0xff]
  %v17 = vld [vmem:[%s0 + $0x18] sm:$0xff]
  %v18 = vld [vmem:[%s1] sm:$0xff]
  %v19 = vld [vmem:[%s1 + $0x8] sm:$0xff]
  %v20 = vld [vmem:[%s1 + $0x10] sm:$0xff]
  %v21 = vld [vmem:[%s1 + $0x18] sm:$0xff]
  %v22 = vld [vmem:[%s1 + $0x20] sm:$0xff]
  %v23 = vld [vmem:[%s1 + $0x28] sm:$0xff]
  %v24 = vld [vmem:[%s1 + $0x30] sm:$0xff]
  %v25 = vld [vmem:[%s1 + $0x38] sm:$0xff]
  %v26 = vld [vmem:[%s1 + $0x40] sm:$0xff]
  %v27 = vld [vmem:[%s1 + $0x48] sm:$0xff]
  %v28 = vld [vmem:[%s1 + $0x50] sm:$0xff]
  %v29 = vld [vmem:[%s1 + $0x58] sm:$0xff]
  %v30 = vld [vmem:[%s1 + $0x60] sm:$0xff]
  %v31 = vld [vmem:[%s1 + $0x68] sm:$0xff]
  %v32 = vld [vmem:[%s1 + $0x70] sm:$0xff]
  %v33 = vld [vmem:[%s1 + $0x78] sm:$0xff]
  %v34 = vld [vmem:[%s1 + $0x80] sm:$0xff]
  %v35 = vld [vmem:[%s1 + $0x88] sm:$0xff]
  %v36 = vld [vmem:[%s1 + $0x90] sm:$0xff]
  %v37 = vld [vmem:[%s1 + $0x98] sm:$0xff]
  %v38 = vld [vmem:[%s1 + $0xa0] sm:$0xf]
  %v39 = vld [vmem:[%s1 + $0xa8] sm:$0xf]
  %v40 = vld [vmem:[%s0 + $0x1] sm:$0xff]
  %v41 = vld [vmem:[%s0 + $0x9] sm:$0xff]
  %v42 = vld [vmem:[%s0 + $0x11] sm:$0xff]
  %v43 = vld [vmem:[%s0 + $0x19] sm:$0xff]
  %s44 = scalar_lea.vmem %s1, 176
  %v45 = vld [vmem:[%s44] sm:$0xff]
  %v46 = vld [vmem:[%s44 + $0x8] sm:$0xff]
  %v47 = vld [vmem:[%s44 + $0x10] sm:$0xff]
  %v48 = vld [vmem:[%s44 + $0x18] sm:$0xff]
  %v49 = vld [vmem:[%s44 + $0x20] sm:$0xff]
  %v50 = vld [vmem:[%s44 + $0x28] sm:$0xff]
  %v51 = vld [vmem:[%s44 + $0x30] sm:$0xff]
  %v52 = vld [vmem:[%s44 + $0x38] sm:$0xff]
  %v53 = vld [vmem:[%s44 + $0x40] sm:$0xff]
  %v54 = vld [vmem:[%s44 + $0x48] sm:$0xff]
  %v55 = vld [vmem:[%s44 + $0x50] sm:$0xff]
  %v56 = vld [vmem:[%s44 + $0x58] sm:$0xff]
  %v57 = vld [vmem:[%s44 + $0x60] sm:$0xff]
  %v58 = vld [vmem:[%s44 + $0x68] sm:$0xff]
  %v59 = vld [vmem:[%s44 + $0x70] sm:$0xff]
  %v60 = vld [vmem:[%s44 + $0x78] sm:$0xff]
  %v61 = vld [vmem:[%s44 + $0x80] sm:$0xff]
  %v62 = vld [vmem:[%s44 + $0x88] sm:$0xff]
  %v63 = vld [vmem:[%s44 + $0x90] sm:$0xff]
  %v64 = vld [vmem:[%s44 + $0x98] sm:$0xff]
  %v65 = vld [vmem:[%s44 + $0xa0] sm:$0xf]
  %v66 = vld [vmem:[%s44 + $0xa8] sm:$0xf]
  %vm67 = vcmask 687104
  %v69 = vsel %vm67, %v40, 0
  %v72 = vsel %vm67, %v41, 0
  %v75 = vsel %vm67, %v42, 0
  %v78 = vsel %vm67, %v43, 0
  %vm80 = vcmask 1043456
  %v82 = vsel %vm80, %v65, 0
  %v85 = vsel %vm80, %v66, 0
  %87 = vmatprep.subr.mxu0 %v46
  %88 = vmatpush1.msra.mxu0 %v45
  %89 = vmatprep.subr.mxu0 %v48
  %90 = vmatpush1.msra.mxu0 %v47
  %91 = vmatprep.subr.mxu0 %v50
  %92 = vmatpush1.msra.mxu0 %v49
  %93 = vmatprep.subr.mxu0 %v52
  %94 = vmatpush1.msra.mxu0 %v51
  %95 = vmatprep.subr.mxu0 %v54
  %96 = vmatpush1.msra.mxu0 %v53
  %97 = vmatprep.subr.mxu0 %v56
  %98 = vmatpush1.msra.mxu0 %v55
  %99 = vmatprep.subr.mxu0 %v58
  %100 = vmatpush1.msra.mxu0 %v57
  %101 = vmatprep.subr.mxu0 %v60
  %102 = vmatpush1.msra.mxu0 %v59
  %103 = vmatprep.subr.mxu0 %v62
  %104 = vmatpush1.msra.mxu0 %v61
  %105 = vmatprep.subr.mxu0 %v64
  %106 = vmatpush1.msra.mxu0 %v63
  %107 = vmatprep.subr.mxu0 %v85
  %108 = vmatpush1.msra.mxu0 %v82
  %109 = vmatprep.subr.mxu0 0.0
  %110 = vmatpush1.msra.mxu0 0.0
  %111 = vmatprep.subr.mxu0 0.0
  %112 = vmatpush1.msra.mxu0 0.0
  %113 = vmatprep.subr.mxu0 0.0
  %114 = vmatpush1.msra.mxu0 0.0
  %115 = vmatprep.subr.mxu0 0.0
  %116 = vmatpush1.msra.mxu0 0.0
  %117 = vmatprep.subr.mxu0 0.0
  %118 = vmatpush1.msra.mxu0 0.0
  %119 = vmatprep.subr.mxu0 0.0
  %120 = vmatpush1.msra.mxu0 0.0
  %121 = vmatprep.subr.mxu0 0.0
  %122 = vmatpush1.msra.mxu0 0.0
  %123 = vmatprep.subr.mxu0 0.0
  %124 = vmatpush1.msra.mxu0 0.0
  %125 = vmatprep.subr.mxu0 0.0
  %126 = vmatpush1.msra.mxu0 0.0
  %127 = vmatprep.subr.mxu0 0.0
  %128 = vmatpush1.msra.mxu0 0.0
  %129 = vmatprep.subr.mxu0 0.0
  %130 = vmatpush1.msra.mxu0 0.0
  %131 = vmatprep.subr.mxu0 0.0
  %132 = vmatpush1.msra.mxu0 0.0
  %133 = vmatprep.subr.mxu0 0.0
  %134 = vmatpush1.msra.mxu0 0.0
  %135 = vmatprep.subr.mxu0 0.0
  %136 = vmatpush1.msra.mxu0 0.0
  %137 = vmatprep.subr.mxu0 0.0
  %138 = vmatpush1.msra.mxu0 0.0
  %139 = vmatprep.subr.mxu0 0.0
  %140 = vmatpush1.msra.mxu0 0.0
  %141 = vmatprep.subr.mxu0 0.0
  %142 = vmatpush1.msra.mxu0 0.0
  %143 = vmatprep.subr.mxu0 0.0
  %144 = vmatpush1.msra.mxu0 0.0
  %145 = vmatprep.subr.mxu0 0.0
  %146 = vmatpush1.msra.mxu0 0.0
  %147 = vmatprep.subr.mxu0 0.0
  %148 = vmatpush1.msra.mxu0 0.0
  %149 = vmatprep.subr.mxu0 0.0
  %150 = vmatpush1.msra.mxu0 0.0
  %151 = vmatprep.mubr.f32.mxu0 0.0
  %152 = vmatmul.mubr.f32.gmra.mrb[0].mxu0 %v69
  %v153 = vpop.f32.mrb[0].mxu0
  %v154 = vadd.f32 0.0, %v153
  %v155 = vpop.f32.mrb[0].mxu0
  %v156 = vadd.f32 0.0, %v155
  %157 = vmatprep.mubr.f32.mxu0 0.0
  %158 = vmatmul.mubr.f32.gmra.mrb[0].mxu0 %v72
  %v159 = vpop.f32.mrb[0].mxu0
  %v160 = vadd.f32 0.0, %v159
  %v161 = vpop.f32.mrb[0].mxu0
  %v162 = vadd.f32 0.0, %v161
  %163 = vmatprep.mubr.f32.mxu0 0.0
  %164 = vmatmul.mubr.f32.gmra.mrb[0].mxu0 %v75
  %v165 = vpop.f32.mrb[0].mxu0
  %v166 = vadd.f32 0.0, %v165
  %v167 = vpop.f32.mrb[0].mxu0
  %v168 = vadd.f32 0.0, %v167
  %169 = vmatprep.mubr.f32.mxu0 0.0
  %170 = vmatmul.mubr.f32.gmra.mrb[0].mxu0 %v78
  %v171 = vpop.f32.mrb[0].mxu0
  %v172 = vadd.f32 0.0, %v171
  %v173 = vpop.f32.mrb[0].mxu0
  %v174 = vadd.f32 0.0, %v173
  %175 = vdwg.mxu0
  %v177 = vsel %vm67, %v14, 0
  %v180 = vsel %vm67, %v15, 0
  %v183 = vsel %vm67, %v16, 0
  %v186 = vsel %vm67, %v17, 0
  %v189 = vsel %vm80, %v38, 0
  %v192 = vsel %vm80, %v39, 0
  %194 = vmatprep.subr.mxu0 %v19
  %195 = vmatpush1.msra.mxu0 %v18
  %196 = vmatprep.subr.mxu0 %v21
  %197 = vmatpush1.msra.mxu0 %v20
  %198 = vmatprep.subr.mxu0 %v23
  %199 = vmatpush1.msra.mxu0 %v22
  %200 = vmatprep.subr.mxu0 %v25
  %201 = vmatpush1.msra.mxu0 %v24
  %202 = vmatprep.subr.mxu0 %v27
  %203 = vmatpush1.msra.mxu0 %v26
  %204 = vmatprep.subr.mxu0 %v29
  %205 = vmatpush1.msra.mxu0 %v28
  %206 = vmatprep.subr.mxu0 %v31
  %207 = vmatpush1.msra.mxu0 %v30
  %208 = vmatprep.subr.mxu0 %v33
  %209 = vmatpush1.msra.mxu0 %v32
  %210 = vmatprep.subr.mxu0 %v35
  %211 = vmatpush1.msra.mxu0 %v34
  %212 = vmatprep.subr.mxu0 %v37
  %213 = vmatpush1.msra.mxu0 %v36
  %214 = vmatprep.subr.mxu0 %v192
  %215 = vmatpush1.msra.mxu0 %v189
  %216 = vmatprep.subr.mxu0 0.0
  %217 = vmatpush1.msra.mxu0 0.0
  %218 = vmatprep.subr.mxu0 0.0
  %219 = vmatpush1.msra.mxu0 0.0
  %220 = vmatprep.subr.mxu0 0.0
  %221 = vmatpush1.msra.mxu0 0.0
  %222 = vmatprep.subr.mxu0 0.0
  %223 = vmatpush1.msra.mxu0 0.0
  %224 = vmatprep.subr.mxu0 0.0
  %225 = vmatpush1.msra.mxu0 0.0
  %226 = vmatprep.subr.mxu0 0.0
  %227 = vmatpush1.msra.mxu0 0.0
  %228 = vmatprep.subr.mxu0 0.0
  %229 = vmatpush1.msra.mxu0 0.0
  %230 = vmatprep.subr.mxu0 0.0
  %231 = vmatpush1.msra.mxu0 0.0
  %232 = vmatprep.subr.mxu0 0.0
  %233 = vmatpush1.msra.mxu0 0.0
  %234 = vmatprep.subr.mxu0 0.0
  %235 = vmatpush1.msra.mxu0 0.0
  %236 = vmatprep.subr.mxu0 0.0
  %237 = vmatpush1.msra.mxu0 0.0
  %238 = vmatprep.subr.mxu0 0.0
  %239 = vmatpush1.msra.mxu0 0.0
  %240 = vmatprep.subr.mxu0 0.0
  %241 = vmatpush1.msra.mxu0 0.0
  %242 = vmatprep.subr.mxu0 0.0
  %243 = vmatpush1.msra.mxu0 0.0
  %244 = vmatprep.subr.mxu0 0.0
  %245 = vmatpush1.msra.mxu0 0.0
  %246 = vmatprep.subr.mxu0 0.0
  %247 = vmatpush1.msra.mxu0 0.0
  %248 = vmatprep.subr.mxu0 0.0
  %249 = vmatpush1.msra.mxu0 0.0
  %250 = vmatprep.subr.mxu0 0.0
  %251 = vmatpush1.msra.mxu0 0.0
  %252 = vmatprep.subr.mxu0 0.0
  %253 = vmatpush1.msra.mxu0 0.0
  %254 = vmatprep.subr.mxu0 0.0
  %255 = vmatpush1.msra.mxu0 0.0
  %256 = vmatprep.subr.mxu0 0.0
  %257 = vmatpush1.msra.mxu0 0.0
  %258 = vmatprep.mubr.f32.mxu0 0.0
  %259 = vmatmul.mubr.f32.gmra.mrb[0].mxu0 %v177
  %v260 = vpop.f32.mrb[0].mxu0
  %v261 = vadd.f32 %v154, %v260
  %v262 = vpop.f32.mrb[0].mxu0
  %v263 = vadd.f32 %v156, %v262
  %264 = vmatprep.mubr.f32.mxu0 0.0
  %265 = vmatmul.mubr.f32.gmra.mrb[0].mxu0 %v180
  %v266 = vpop.f32.mrb[0].mxu0
  %v267 = vadd.f32 %v160, %v266
  %v268 = vpop.f32.mrb[0].mxu0
  %v269 = vadd.f32 %v162, %v268
  %270 = vmatprep.mubr.f32.mxu0 0.0
  %271 = vmatmul.mubr.f32.gmra.mrb[0].mxu0 %v183
  %v272 = vpop.f32.mrb[0].mxu0
  %v273 = vadd.f32 %v166, %v272
  %v274 = vpop.f32.mrb[0].mxu0
  %v275 = vadd.f32 %v168, %v274
  %276 = vmatprep.mubr.f32.mxu0 0.0
  %277 = vmatmul.mubr.f32.gmra.mrb[0].mxu0 %v186
  %v278 = vpop.f32.mrb[0].mxu0
  %v279 = vadd.f32 %v172, %v278
  %v280 = vpop.f32.mrb[0].mxu0
  %v281 = vadd.f32 %v174, %v280
  %282 = vdwg.mxu0
  %v283 = vld [vmem:[%s0 + $0x2] sm:$0xff]
  %v284 = vld [vmem:[%s0 + $0xa] sm:$0xff]
  %v285 = vld [vmem:[%s0 + $0x12] sm:$0xff]
  %v286 = vld [vmem:[%s0 + $0x1a] sm:$0xff]
  %s287 = scalar_lea.vmem %s1, 352
  %v288 = vld [vmem:[%s287] sm:$0xff]
  %v289 = vld [vmem:[%s287 + $0x8] sm:$0xff]
  %v290 = vld [vmem:[%s287 + $0x10] sm:$0xff]
  %v291 = vld [vmem:[%s287 + $0x18] sm:$0xff]
  %v292 = vld [vmem:[%s287 + $0x20] sm:$0xff]
  %v293 = vld [vmem:[%s287 + $0x28] sm:$0xff]
  %v294 = vld [vmem:[%s287 + $0x30] sm:$0xff]
  %v295 = vld [vmem:[%s287 + $0x38] sm:$0xff]
  %v296 = vld [vmem:[%s287 + $0x40] sm:$0xff]
  %v297 = vld [vmem:[%s287 + $0x48] sm:$0xff]
  %v298 = vld [vmem:[%s287 + $0x50] sm:$0xff]
  %v299 = vld [vmem:[%s287 + $0x58] sm:$0xff]
  %v300 = vld [vmem:[%s287 + $0x60] sm:$0xff]
  %v301 = vld [vmem:[%s287 + $0x68] sm:$0xff]
  %v302 = vld [vmem:[%s287 + $0x70] sm:$0xff]
  %v303 = vld [vmem:[%s287 + $0x78] sm:$0xff]
  %v304 = vld [vmem:[%s287 + $0x80] sm:$0xff]
  %v305 = vld [vmem:[%s287 + $0x88] sm:$0xff]
  %v306 = vld [vmem:[%s287 + $0x90] sm:$0xff]
  %v307 = vld [vmem:[%s287 + $0x98] sm:$0xff]
  %v308 = vld [vmem:[%s287 + $0xa0] sm:$0xf]
  %v309 = vld [vmem:[%s287 + $0xa8] sm:$0xf]
  %v311 = vsel %vm67, %v283, 0
  %v314 = vsel %vm67, %v284, 0
  %v317 = vsel %vm67, %v285, 0
  %v320 = vsel %vm67, %v286, 0
  %v323 = vsel %vm80, %v308, 0
  %v326 = vsel %vm80, %v309, 0
  %328 = vmatprep.subr.mxu0 %v289
  %329 = vmatpush1.msra.mxu0 %v288
  %330 = vmatprep.subr.mxu0 %v291
  %331 = vmatpush1.msra.mxu0 %v290
  %332 = vmatprep.subr.mxu0 %v293
  %333 = vmatpush1.msra.mxu0 %v292
  %334 = vmatprep.subr.mxu0 %v295
  %335 = vmatpush1.msra.mxu0 %v294
  %336 = vmatprep.subr.mxu0 %v297
  %337 = vmatpush1.msra.mxu0 %v296
  %338 = vmatprep.subr.mxu0 %v299
  %339 = vmatpush1.msra.mxu0 %v298
  %340 = vmatprep.subr.mxu0 %v301
  %341 = vmatpush1.msra.mxu0 %v300
  %342 = vmatprep.subr.mxu0 %v303
  %343 = vmatpush1.msra.mxu0 %v302
  %344 = vmatprep.subr.mxu0 %v305
  %345 = vmatpush1.msra.mxu0 %v304
  %346 = vmatprep.subr.mxu0 %v307
  %347 = vmatpush1.msra.mxu0 %v306
  %348 = vmatprep.subr.mxu0 %v326
  %349 = vmatpush1.msra.mxu0 %v323
  %350 = vmatprep.subr.mxu0 0.0
  %351 = vmatpush1.msra.mxu0 0.0
  %352 = vmatprep.subr.mxu0 0.0
  %353 = vmatpush1.msra.mxu0 0.0
  %354 = vmatprep.subr.mxu0 0.0
  %355 = vmatpush1.msra.mxu0 0.0
  %356 = vmatprep.subr.mxu0 0.0
  %357 = vmatpush1.msra.mxu0 0.0
  %358 = vmatprep.subr.mxu0 0.0
  %359 = vmatpush1.msra.mxu0 0.0
  %360 = vmatprep.subr.mxu0 0.0
  %361 = vmatpush1.msra.mxu0 0.0
  %362 = vmatprep.subr.mxu0 0.0
  %363 = vmatpush1.msra.mxu0 0.0
  %364 = vmatprep.subr.mxu0 0.0
  %365 = vmatpush1.msra.mxu0 0.0
  %366 = vmatprep.subr.mxu0 0.0
  %367 = vmatpush1.msra.mxu0 0.0
  %368 = vmatprep.subr.mxu0 0.0
  %369 = vmatpush1.msra.mxu0 0.0
  %370 = vmatprep.subr.mxu0 0.0
  %371 = vmatpush1.msra.mxu0 0.0
  %372 = vmatprep.subr.mxu0 0.0
  %373 = vmatpush1.msra.mxu0 0.0
  %374 = vmatprep.subr.mxu0 0.0
  %375 = vmatpush1.msra.mxu0 0.0
  %376 = vmatprep.subr.mxu0 0.0
  %377 = vmatpush1.msra.mxu0 0.0
  %378 = vmatprep.subr.mxu0 0.0
  %379 = vmatpush1.msra.mxu0 0.0
  %380 = vmatprep.subr.mxu0 0.0
  %381 = vmatpush1.msra.mxu0 0.0
  %382 = vmatprep.subr.mxu0 0.0
  %383 = vmatpush1.msra.mxu0 0.0
  %384 = vmatprep.subr.mxu0 0.0
  %385 = vmatpush1.msra.mxu0 0.0
  %386 = vmatprep.subr.mxu0 0.0
  %387 = vmatpush1.msra.mxu0 0.0
  %388 = vmatprep.subr.mxu0 0.0
  %389 = vmatpush1.msra.mxu0 0.0
  %390 = vmatprep.subr.mxu0 0.0
  %391 = vmatpush1.msra.mxu0 0.0
  %392 = vmatprep.mubr.f32.mxu0 0.0
  %393 = vmatmul.mubr.f32.gmra.mrb[0].mxu0 %v311
  %v394 = vpop.f32.mrb[0].mxu0
  %v395 = vadd.f32 0.0, %v394
  %v396 = vpop.f32.mrb[0].mxu0
  %v397 = vadd.f32 0.0, %v396
  %398 = vmatprep.mubr.f32.mxu0 0.0
  %399 = vmatmul.mubr.f32.gmra.mrb[0].mxu0 %v314
  %v400 = vpop.f32.mrb[0].mxu0
  %v401 = vadd.f32 0.0, %v400
  %v402 = vpop.f32.mrb[0].mxu0
  %v403 = vadd.f32 0.0, %v402
  %404 = vmatprep.mubr.f32.mxu0 0.0
  %405 = vmatmul.mubr.f32.gmra.mrb[0].mxu0 %v317
  %v406 = vpop.f32.mrb[0].mxu0
  %v407 = vadd.f32 0.0, %v406
  %v408 = vpop.f32.mrb[0].mxu0
  %v409 = vadd.f32 0.0, %v408
  %410 = vmatprep.mubr.f32.mxu0 0.0
  %411 = vmatmul.mubr.f32.gmra.mrb[0].mxu0 %v320
  %v412 = vpop.f32.mrb[0].mxu0
  %v413 = vadd.f32 0.0, %v412
  %v414 = vpop.f32.mrb[0].mxu0
  %v415 = vadd.f32 0.0, %v414
  %416 = vdwg.mxu0
  %v417 = vadd.f32 %v261, %v395
  %v418 = vadd.f32 %v263, %v397
  %v419 = vadd.f32 %v267, %v401
  %v420 = vadd.f32 %v269, %v403
  %v421 = vadd.f32 %v273, %v407
  %v422 = vadd.f32 %v275, %v409
  %v423 = vadd.f32 %v279, %v413
  %v424 = vadd.f32 %v281, %v415
  %v425 = vld [vmem:[%s0 + $0x3] sm:$0xff]
  %v426 = vld [vmem:[%s0 + $0xb] sm:$0xff]
  %v427 = vld [vmem:[%s0 + $0x13] sm:$0xff]
  %v428 = vld [vmem:[%s0 + $0x1b] sm:$0xff]
  %s429 = scalar_lea.vmem %s1, 528
  %v430 = vld [vmem:[%s429] sm:$0xff]
  %v431 = vld [vmem:[%s429 + $0x8] sm:$0xff]
  %v432 = vld [vmem:[%s429 + $0x10] sm:$0xff]
  %v433 = vld [vmem:[%s429 + $0x18] sm:$0xff]
  %v434 = vld [vmem:[%s429 + $0x20] sm:$0xff]
  %v435 = vld [vmem:[%s429 + $0x28] sm:$0xff]
  %v436 = vld [vmem:[%s429 + $0x30] sm:$0xff]
  %v437 = vld [vmem:[%s429 + $0x38] sm:$0xff]
  %v438 = vld [vmem:[%s429 + $0x40] sm:$0xff]
  %v439 = vld [vmem:[%s429 + $0x48] sm:$0xff]
  %v440 = vld [vmem:[%s429 + $0x50] sm:$0xff]
  %v441 = vld [vmem:[%s429 + $0x58] sm:$0xff]
  %v442 = vld [vmem:[%s429 + $0x60] sm:$0xff]
  %v443 = vld [vmem:[%s429 + $0x68] sm:$0xff]
  %v444 = vld [vmem:[%s429 + $0x70] sm:$0xff]
  %v445 = vld [vmem:[%s429 + $0x78] sm:$0xff]
  %v446 = vld [vmem:[%s429 + $0x80] sm:$0xff]
  %v447 = vld [vmem:[%s429 + $0x88] sm:$0xff]
  %v448 = vld [vmem:[%s429 + $0x90] sm:$0xff]
  %v449 = vld [vmem:[%s429 + $0x98] sm:$0xff]
  %v450 = vld [vmem:[%s429 + $0xa0] sm:$0xf]
  %v451 = vld [vmem:[%s429 + $0xa8] sm:$0xf]
  %v453 = vsel %vm67, %v425, 0
  %v456 = vsel %vm67, %v426, 0
  %v459 = vsel %vm67, %v427, 0
  %v462 = vsel %vm67, %v428, 0
  %v465 = vsel %vm80, %v450, 0
  %v468 = vsel %vm80, %v451, 0
  %470 = vmatprep.subr.mxu0 %v431
  %471 = vmatpush1.msra.mxu0 %v430
  %472 = vmatprep.subr.mxu0 %v433
  %473 = vmatpush1.msra.mxu0 %v432
  %474 = vmatprep.subr.mxu0 %v435
  %475 = vmatpush1.msra.mxu0 %v434
  %476 = vmatprep.subr.mxu0 %v437
  %477 = vmatpush1.msra.mxu0 %v436
  %478 = vmatprep.subr.mxu0 %v439
  %479 = vmatpush1.msra.mxu0 %v438
  %480 = vmatprep.subr.mxu0 %v441
  %481 = vmatpush1.msra.mxu0 %v440
  %482 = vmatprep.subr.mxu0 %v443
  %483 = vmatpush1.msra.mxu0 %v442
  %484 = vmatprep.subr.mxu0 %v445
  %485 = vmatpush1.msra.mxu0 %v444
  %486 = vmatprep.subr.mxu0 %v447
  %487 = vmatpush1.msra.mxu0 %v446
  %488 = vmatprep.subr.mxu0 %v449
  %489 = vmatpush1.msra.mxu0 %v448
  %490 = vmatprep.subr.mxu0 %v468
  %491 = vmatpush1.msra.mxu0 %v465
  %492 = vmatprep.subr.mxu0 0.0
  %493 = vmatpush1.msra.mxu0 0.0
  %494 = vmatprep.subr.mxu0 0.0
  %495 = vmatpush1.msra.mxu0 0.0
  %496 = vmatprep.subr.mxu0 0.0
  %497 = vmatpush1.msra.mxu0 0.0
  %498 = vmatprep.subr.mxu0 0.0
  %499 = vmatpush1.msra.mxu0 0.0
  %500 = vmatprep.subr.mxu0 0.0
  %501 = vmatpush1.msra.mxu0 0.0
  %502 = vmatprep.subr.mxu0 0.0
  %503 = vmatpush1.msra.mxu0 0.0
  %504 = vmatprep.subr.mxu0 0.0
  %505 = vmatpush1.msra.mxu0 0.0
  %506 = vmatprep.subr.mxu0 0.0
  %507 = vmatpush1.msra.mxu0 0.0
  %508 = vmatprep.subr.mxu0 0.0
  %509 = vmatpush1.msra.mxu0 0.0
  %510 = vmatprep.subr.mxu0 0.0
  %511 = vmatpush1.msra.mxu0 0.0
  %512 = vmatprep.subr.mxu0 0.0
  %513 = vmatpush1.msra.mxu0 0.0
  %514 = vmatprep.subr.mxu0 0.0
  %515 = vmatpush1.msra.mxu0 0.0
  %516 = vmatprep.subr.mxu0 0.0
  %517 = vmatpush1.msra.mxu0 0.0
  %518 = vmatprep.subr.mxu0 0.0
  %519 = vmatpush1.msra.mxu0 0.0
  %520 = vmatprep.subr.mxu0 0.0
  %521 = vmatpush1.msra.mxu0 0.0
  %522 = vmatprep.subr.mxu0 0.0
  %523 = vmatpush1.msra.mxu0 0.0
  %524 = vmatprep.subr.mxu0 0.0
  %525 = vmatpush1.msra.mxu0 0.0
  %526 = vmatprep.subr.mxu0 0.0
  %527 = vmatpush1.msra.mxu0 0.0
  %528 = vmatprep.subr.mxu0 0.0
  %529 = vmatpush1.msra.mxu0 0.0
  %530 = vmatprep.subr.mxu0 0.0
  %531 = vmatpush1.msra.mxu0 0.0
  %532 = vmatprep.subr.mxu0 0.0
  %533 = vmatpush1.msra.mxu0 0.0
  %534 = vmatprep.mubr.f32.mxu0 0.0
  %535 = vmatmul.mubr.f32.gmra.mrb[0].mxu0 %v453
  %v536 = vpop.f32.mrb[0].mxu0
  %v537 = vadd.f32 0.0, %v536
  %v538 = vpop.f32.mrb[0].mxu0
  %v539 = vadd.f32 0.0, %v538
  %540 = vmatprep.mubr.f32.mxu0 0.0
  %541 = vmatmul.mubr.f32.gmra.mrb[0].mxu0 %v456
  %v542 = vpop.f32.mrb[0].mxu0
  %v543 = vadd.f32 0.0, %v542
  %v544 = vpop.f32.mrb[0].mxu0
  %v545 = vadd.f32 0.0, %v544
  %546 = vmatprep.mubr.f32.mxu0 0.0
  %547 = vmatmul.mubr.f32.gmra.mrb[0].mxu0 %v459
  %v548 = vpop.f32.mrb[0].mxu0
  %v549 = vadd.f32 0.0, %v548
  %v550 = vpop.f32.mrb[0].mxu0
  %v551 = vadd.f32 0.0, %v550
  %552 = vmatprep.mubr.f32.mxu0 0.0
  %553 = vmatmul.mubr.f32.gmra.mrb[0].mxu0 %v462
  %v554 = vpop.f32.mrb[0].mxu0
  %v555 = vadd.f32 0.0, %v554
  %v556 = vpop.f32.mrb[0].mxu0
  %v557 = vadd.f32 0.0, %v556
  %558 = vdwg.mxu0
  %v559 = vadd.f32 %v417, %v537
  %v560 = vadd.f32 %v418, %v539
  %v561 = vadd.f32 %v419, %v543
  %v562 = vadd.f32 %v420, %v545
  %v563 = vadd.f32 %v421, %v549
  %v564 = vadd.f32 %v422, %v551
  %v565 = vadd.f32 %v423, %v555
  %v566 = vadd.f32 %v424, %v557
  %v567 = vld [vmem:[%s0 + $0x4] sm:$0xff]
  %v568 = vld [vmem:[%s0 + $0xc] sm:$0xff]
  %v569 = vld [vmem:[%s0 + $0x14] sm:$0xff]
  %v570 = vld [vmem:[%s0 + $0x1c] sm:$0xff]
  %s571 = scalar_lea.vmem %s1, 704
  %v572 = vld [vmem:[%s571] sm:$0xff]
  %v573 = vld [vmem:[%s571 + $0x8] sm:$0xff]
  %v574 = vld [vmem:[%s571 + $0x10] sm:$0xff]
  %v575 = vld [vmem:[%s571 + $0x18] sm:$0xff]
  %v576 = vld [vmem:[%s571 + $0x20] sm:$0xff]
  %v577 = vld [vmem:[%s571 + $0x28] sm:$0xff]
  %v578 = vld [vmem:[%s571 + $0x30] sm:$0xff]
  %v579 = vld [vmem:[%s571 + $0x38] sm:$0xff]
  %v580 = vld [vmem:[%s571 + $0x40] sm:$0xff]
  %v581 = vld [vmem:[%s571 + $0x48] sm:$0xff]
  %v582 = vld [vmem:[%s571 + $0x50] sm:$0xff]
  %v583 = vld [vmem:[%s571 + $0x58] sm:$0xff]
  %v584 = vld [vmem:[%s571 + $0x60] sm:$0xff]
  %v585 = vld [vmem:[%s571 + $0x68] sm:$0xff]
  %v586 = vld [vmem:[%s571 + $0x70] sm:$0xff]
  %v587 = vld [vmem:[%s571 + $0x78] sm:$0xff]
  %v588 = vld [vmem:[%s571 + $0x80] sm:$0xff]
  %v589 = vld [vmem:[%s571 + $0x88] sm:$0xff]
  %v590 = vld [vmem:[%s571 + $0x90] sm:$0xff]
  %v591 = vld [vmem:[%s571 + $0x98] sm:$0xff]
  %v592 = vld [vmem:[%s571 + $0xa0] sm:$0xf]
  %v593 = vld [vmem:[%s571 + $0xa8] sm:$0xf]
  %v595 = vsel %vm67, %v567, 0
  %v598 = vsel %vm67, %v568, 0
  %v601 = vsel %vm67, %v569, 0
  %v604 = vsel %vm67, %v570, 0
  %v607 = vsel %vm80, %v592, 0
  %v610 = vsel %vm80, %v593, 0
  %612 = vmatprep.subr.mxu0 %v573
  %613 = vmatpush1.msra.mxu0 %v572
  %614 = vmatprep.subr.mxu0 %v575
  %615 = vmatpush1.msra.mxu0 %v574
  %616 = vmatprep.subr.mxu0 %v577
  %617 = vmatpush1.msra.mxu0 %v576
  %618 = vmatprep.subr.mxu0 %v579
  %619 = vmatpush1.msra.mxu0 %v578
  %620 = vmatprep.subr.mxu0 %v581
  %621 = vmatpush1.msra.mxu0 %v580
  %622 = vmatprep.subr.mxu0 %v583
  %623 = vmatpush1.msra.mxu0 %v582
  %624 = vmatprep.subr.mxu0 %v585
  %625 = vmatpush1.msra.mxu0 %v584
  %626 = vmatprep.subr.mxu0 %v587
  %627 = vmatpush1.msra.mxu0 %v586
  %628 = vmatprep.subr.mxu0 %v589
  %629 = vmatpush1.msra.mxu0 %v588
  %630 = vmatprep.subr.mxu0 %v591
  %631 = vmatpush1.msra.mxu0 %v590
  %632 = vmatprep.subr.mxu0 %v610
  %633 = vmatpush1.msra.mxu0 %v607
  %634 = vmatprep.subr.mxu0 0.0
  %635 = vmatpush1.msra.mxu0 0.0
  %636 = vmatprep.subr.mxu0 0.0
  %637 = vmatpush1.msra.mxu0 0.0
  %638 = vmatprep.subr.mxu0 0.0
  %639 = vmatpush1.msra.mxu0 0.0
  %640 = vmatprep.subr.mxu0 0.0
  %641 = vmatpush1.msra.mxu0 0.0
  %642 = vmatprep.subr.mxu0 0.0
  %643 = vmatpush1.msra.mxu0 0.0
  %644 = vmatprep.subr.mxu0 0.0
  %645 = vmatpush1.msra.mxu0 0.0
  %646 = vmatprep.subr.mxu0 0.0
  %647 = vmatpush1.msra.mxu0 0.0
  %648 = vmatprep.subr.mxu0 0.0
  %649 = vmatpush1.msra.mxu0 0.0
  %650 = vmatprep.subr.mxu0 0.0
  %651 = vmatpush1.msra.mxu0 0.0
  %652 = vmatprep.subr.mxu0 0.0
  %653 = vmatpush1.msra.mxu0 0.0
  %654 = vmatprep.subr.mxu0 0.0
  %655 = vmatpush1.msra.mxu0 0.0
  %656 = vmatprep.subr.mxu0 0.0
  %657 = vmatpush1.msra.mxu0 0.0
  %658 = vmatprep.subr.mxu0 0.0
  %659 = vmatpush1.msra.mxu0 0.0
  %660 = vmatprep.subr.mxu0 0.0
  %661 = vmatpush1.msra.mxu0 0.0
  %662 = vmatprep.subr.mxu0 0.0
  %663 = vmatpush1.msra.mxu0 0.0
  %664 = vmatprep.subr.mxu0 0.0
  %665 = vmatpush1.msra.mxu0 0.0
  %666 = vmatprep.subr.mxu0 0.0
  %667 = vmatpush1.msra.mxu0 0.0
  %668 = vmatprep.subr.mxu0 0.0
  %669 = vmatpush1.msra.mxu0 0.0
  %670 = vmatprep.subr.mxu0 0.0
  %671 = vmatpush1.msra.mxu0 0.0
  %672 = vmatprep.subr.mxu0 0.0
  %673 = vmatpush1.msra.mxu0 0.0
  %674 = vmatprep.subr.mxu0 0.0
  %675 = vmatpush1.msra.mxu0 0.0
  %676 = vmatprep.mubr.f32.mxu0 0.0
  %677 = vmatmul.mubr.f32.gmra.mrb[0].mxu0 %v595
  %v678 = vpop.f32.mrb[0].mxu0
  %v679 = vadd.f32 0.0, %v678
  %v680 = vpop.f32.mrb[0].mxu0
  %v681 = vadd.f32 0.0, %v680
  %682 = vmatprep.mubr.f32.mxu0 0.0
  %683 = vmatmul.mubr.f32.gmra.mrb[0].mxu0 %v598
  %v684 = vpop.f32.mrb[0].mxu0
  %v685 = vadd.f32 0.0, %v684
  %v686 = vpop.f32.mrb[0].mxu0
  %v687 = vadd.f32 0.0, %v686
  %688 = vmatprep.mubr.f32.mxu0 0.0
  %689 = vmatmul.mubr.f32.gmra.mrb[0].mxu0 %v601
  %v690 = vpop.f32.mrb[0].mxu0
  %v691 = vadd.f32 0.0, %v690
  %v692 = vpop.f32.mrb[0].mxu0
  %v693 = vadd.f32 0.0, %v692
  %694 = vmatprep.mubr.f32.mxu0 0.0
  %695 = vmatmul.mubr.f32.gmra.mrb[0].mxu0 %v604
  %v696 = vpop.f32.mrb[0].mxu0
  %v697 = vadd.f32 0.0, %v696
  %v698 = vpop.f32.mrb[0].mxu0
  %v699 = vadd.f32 0.0, %v698
  %700 = vdwg.mxu0
  %v701 = vadd.f32 %v559, %v679
  %v702 = vadd.f32 %v560, %v681
  %v703 = vadd.f32 %v561, %v685
  %v704 = vadd.f32 %v562, %v687
  %v705 = vadd.f32 %v563, %v691
  %v706 = vadd.f32 %v564, %v693
  %v707 = vadd.f32 %v565, %v697
  %v708 = vadd.f32 %v566, %v699
  %v709 = vld [vmem:[%s2] sm:$0x3]
  %v711 = vlaneseq
  %v712 = vshrl.u32 %v711, 7
  %v713 = vsub.s32 0, %v712
  %v714 = vrot.slane %v709, %v713
  %v715 = vlaneseq
  %v716 = vshrl.u32 %v715, 7
  %v717 = vsub.s32 1, %v716
  %v718 = vrot.slane %v709, %v717
  %v721 = vadd.f32 %v701, %v714
  %v722 = vadd.f32 %v702, %v718
  %v723 = vadd.f32 %v703, %v714
  %v724 = vadd.f32 %v704, %v718
  %v725 = vadd.f32 %v705, %v714
  %v726 = vadd.f32 %v706, %v718
  %v727 = vadd.f32 %v707, %v714
  %v728 = vadd.f32 %v708, %v718
  %v729 = vtanh.pop %v721
  %v730 = vtanh.pop %v722
  %v731 = vtanh.pop %v723
  %v732 = vtanh.pop %v724
  %v733 = vtanh.pop %v725
  %v734 = vtanh.pop %v726
  %v735 = vtanh.pop %v727
  %v736 = vtanh.pop %v728
  %745 = vrot.lane.b32.xlu0 %v729, 112
  %v746 = vpop.permute.xlu0 %745
  %747 = vrot.lane.b32.xlu0 %v730, 112
  %v748 = vpop.permute.xlu0 %747
  %749 = vrot.lane.b32.xlu0 %v731, 112
  %v750 = vpop.permute.xlu0 %749
  %751 = vrot.lane.b32.xlu0 %v732, 112
  %v752 = vpop.permute.xlu0 %751
  %753 = vrot.lane.b32.xlu0 %v733, 112
  %v754 = vpop.permute.xlu0 %753
  %755 = vrot.lane.b32.xlu0 %v734, 112
  %v756 = vpop.permute.xlu0 %755
  %757 = vrot.lane.b32.xlu0 %v735, 112
  %v758 = vpop.permute.xlu0 %757
  %759 = vrot.lane.b32.xlu0 %v736, 112
  %v760 = vpop.permute.xlu0 %759
  %vm761 = vcmask 916480
  %v762 = vsel %vm761, %v746, %v748
  %v763 = vsel %vm761, %v750, %v752
  %v764 = vsel %vm761, %v754, %v756
  %v765 = vsel %vm761, %v758, %v760
  %v774 = vmax.f32 %v729, %v762
  %v775 = vmax.f32 %v730, %v748
  %v776 = vmax.f32 %v731, %v763
  %v777 = vmax.f32 %v732, %v752
  %v778 = vmax.f32 %v733, %v764
  %v779 = vmax.f32 %v734, %v756
  %v780 = vmax.f32 %v735, %v765
  %v781 = vmax.f32 %v736, %v760
  %vm790 = vcmask 1046528
  %v791 = vrot.slane %v774, 1
  %v792 = vrot.slane %v776, 1
  %v793 = vsel %vm790, %v791, %v792
  %v794 = vrot.slane %v775, 1
  %v795 = vrot.slane %v777, 1
  %v796 = vsel %vm790, %v794, %v795
  %v797 = vrot.slane %v778, 1
  %v798 = vsel %vm790, %v792, %v797
  %v799 = vrot.slane %v779, 1
  %v800 = vsel %vm790, %v795, %v799
  %v801 = vrot.slane %v780, 1
  %v802 = vsel %vm790, %v797, %v801
  %v803 = vrot.slane %v781, 1
  %v804 = vsel %vm790, %v799, %v803
  %v813 = vmax.f32 %v774, %v793
  %v814 = vmax.f32 %v775, %v796
  %v815 = vmax.f32 %v776, %v798
  %v816 = vmax.f32 %v777, %v800
  %v817 = vmax.f32 %v778, %v802
  %v818 = vmax.f32 %v779, %v804
  %v819 = vmax.f32 %v780, %v801
  %v820 = vmax.f32 %v781, %v803
  %821 = vst [vmem:[%s3] sm:$0xff] %v813
  %vm822 = vcmask 130048
  %823 = vst.msk [vmem:[%s3 + $0x8] sm:$0xff] %vm822, %v814
  %824 = vst [vmem:[%s3 + $0x10] sm:$0xff] %v815
  %825 = vst.msk [vmem:[%s3 + $0x18] sm:$0xff] %vm822, %v816
  %826 = vst [vmem:[%s3 + $0x20] sm:$0xff] %v817
  %827 = vst.msk [vmem:[%s3 + $0x28] sm:$0xff] %vm822, %v818
  %828 = vst [vmem:[%s3 + $0x30] sm:$0x7f] %v819
  %vm829 = vcmask 129024
  %830 = vst.msk [vmem:[%s3 + $0x38] sm:$0x7f] %vm829, %v820
  // Predicated region
  $region14: #{cs2_forward.1} parent=0 // pred_check
    _
  $region15: #{cs2_forward.1} parent=0 // pred_check_branch
    %832 = sbr.rel (0) target = $region17
  $region16: #{cs2_forward.1} parent=0 // pred_region
    _
  $region17: #{cs2_forward.1} parent=0 // pred_fallthru
    _
  // Predicated region
  $region18: #{cs2_forward.1} parent=0 // pred_check
    _
  $region19: #{cs2_forward.1} parent=0 // pred_check_branch
    %834 = sbr.rel (0) target = $region21
  $region20: #{cs2_forward.1} parent=0 // pred_region
    _
  $region21: #{cs2_forward.1} parent=0 // pred_fallthru
    _

</llo_original>
